<compile_context>
chip_gen: v6e
topology: v6e:2x2x1
jax: 0.10.0
libtpu: 0.0.40
codegen_flags: <defaults>
</compile_context>

<pallas_src>
import jax
import jax.numpy as jnp
import numpy as np
from jax.experimental import pallas as pl
from jax.experimental.pallas import tpu as pltpu

_LANES = 128
_SUBLANES = 8
_TARGET_TILE_BYTES = 2 * 1024 * 1024  # ~2 MB payload per grid step


def _drop_path_kernel(s_ref, x_ref, o_ref):
    # s_ref: (1, 1, 128) per-sample scale broadcast along lanes
    # x_ref/o_ref: (1, TR, 128) feature tile
    o_ref[...] = x_ref[...] * s_ref[...]


def _pick_row_tile(rows: int, itemsize: int) -> int:
    """Largest multiple-of-8 divisor of `rows` whose tile is ~<= 2 MB."""
    target_rows = max(_SUBLANES, _TARGET_TILE_BYTES // (_LANES * itemsize))
    tr = _SUBLANES
    for d in range(_SUBLANES, min(rows, target_rows) + 1, _SUBLANES):
        if rows % d == 0:
            tr = d
    return tr


def drop_path(x, drop_prob: float = 0.0, training: bool = False, seed: int = 0):
    """JAX/Pallas equivalent of drop_path_f (per-sample stochastic depth)."""
    if drop_prob == 0.0 or not training:
        return x
    keep_prob = 1.0 - drop_prob

    B = x.shape[0]
    F = int(np.prod(x.shape[1:])) if x.ndim > 1 else 1

    # --- per-sample scale, computed outside the kernel (plain JAX) ---------
    key = jax.random.PRNGKey(seed)
    u = jax.random.uniform(key, (B,), dtype=jnp.float32)
    mask = jnp.floor(jnp.float32(keep_prob) + u)          # 0.0 or 1.0
    scale = (mask * jnp.float32(1.0 / keep_prob)).astype(x.dtype)
    # Lane-dense (B, 1, 128) so the kernel does a pure vreg broadcast multiply.
    scale_slab = jnp.broadcast_to(scale[:, None, None], (B, 1, _LANES))

    # --- pack features into a sublane/lane-dense (B, rows, 128) slab -------
    pad_unit = _SUBLANES * _LANES                          # 1024
    F_pad = ((F + pad_unit - 1) // pad_unit) * pad_unit
    x2 = x.reshape(B, F)
    if F_pad != F:
        x2 = jnp.pad(x2, ((0, 0), (0, F_pad - F)))
    rows = F_pad // _LANES                                 # multiple of 8
    x3 = x2.reshape(B, rows, _LANES)

    itemsize = jnp.dtype(x.dtype).itemsize
    tr = _pick_row_tile(rows, itemsize)
    grid = (B, rows // tr)

    out = pl.pallas_call(
        _drop_path_kernel,
        out_shape=jax.ShapeDtypeStruct((B, rows, _LANES), x.dtype),
        grid=grid,
        in_specs=[
            pl.BlockSpec((1, 1, _LANES), lambda b, r: (b, 0, 0)),   # scale
            pl.BlockSpec((1, tr, _LANES), lambda b, r: (b, r, 0)),  # x tile
        ],
        out_specs=pl.BlockSpec((1, tr, _LANES), lambda b, r: (b, r, 0)),
        compiler_params=pltpu.CompilerParams(
            dimension_semantics=("parallel", "parallel"),
            vmem_limit_bytes=32 * 1024 * 1024,
        ),
    )(scale_slab, x3)

    out = out.reshape(B, F_pad)[:, :F]
    return out.reshape(x.shape)


class DropPath:
    """Drop paths (Stochastic Depth) per sample, Pallas-backed."""

    def __init__(self, drop_prob=None):
        self.drop_prob = drop_prob
        self.training = True

    def __call__(self, x, seed: int = 0):
        p = 0.0 if self.drop_prob is None else float(self.drop_prob)
        return drop_path(x, p, self.training, seed=seed)


if __name__ == "__main__":
    key = jax.random.PRNGKey(0)
    x = jax.random.normal(key, (2, 4, 16, 16), dtype=jnp.float32)  # NCHW

    module = DropPath(drop_prob=0.25)

    # training=True path: runs the Pallas kernel
    y = module(x, seed=123)
    y = jax.block_until_ready(y)

    # sanity: every sample must be either all-zero or x / keep_prob
    keep_prob = 1.0 - 0.25
    for b in range(x.shape[0]):
        yb = np.asarray(y[b])
        xb = np.asarray(x[b])
        is_dropped = np.allclose(yb, 0.0)
        is_kept = np.allclose(yb, xb / keep_prob, rtol=1e-6, atol=1e-6)
        assert is_dropped or is_kept, "per-sample mask semantics violated"

    # eval path: identity (no kernel), matches torch `not training` branch
    module.training = False
    y_eval = jax.block_until_ready(module(x))
    assert np.allclose(np.asarray(y_eval), np.asarray(x))

    print("KERNEL_OK")
</pallas_src>

<mosaic_0001>
module attributes {stable_mosaic.version = 11 : i64} {
  func.func @_drop_path_kernel(%arg0: i32, %arg1: i32, %arg2: memref<1x1x128xf32, #tpu.memory_space<vmem>>, %arg3: memref<1x8x128xf32, #tpu.memory_space<vmem>>, %arg4: memref<1x8x128xf32, #tpu.memory_space<vmem>>) attributes {dimension_semantics = [#tpu.dimension_semantics<parallel>, #tpu.dimension_semantics<parallel>], iteration_bounds = array<i64: 2, 1>, scalar_prefetch = 0 : i64, scratch_operands = 0 : i64, tpu.core_type = #tpu.core_type<tc>, window_params = [{transform_indices = @transform_0, window_bounds = array<i64: 1, 1, 128>}, {transform_indices = @transform_1, window_bounds = array<i64: 1, 8, 128>}, {transform_indices = @transform_2, window_bounds = array<i64: 1, 8, 128>}]} {
    %c0 = arith.constant 0 : index
    %c0_0 = arith.constant 0 : index
    %c0_1 = arith.constant 0 : index
    %0 = vector.load %arg3[%c0, %c0_0, %c0_1] : memref<1x8x128xf32, #tpu.memory_space<vmem>>, vector<1x8x128xf32>
    %c0_2 = arith.constant 0 : index
    %c0_3 = arith.constant 0 : index
    %c0_4 = arith.constant 0 : index
    %1 = vector.load %arg2[%c0_2, %c0_3, %c0_4] : memref<1x1x128xf32, #tpu.memory_space<vmem>>, vector<1x1x128xf32>
    %2 = vector.broadcast %1 : vector<1x1x128xf32> to vector<1x8x128xf32>
    %3 = arith.mulf %0, %2 : vector<1x8x128xf32>
    %c0_5 = arith.constant 0 : index
    %c0_6 = arith.constant 0 : index
    %c0_7 = arith.constant 0 : index
    %4 = vector.load %arg4[%c0_5, %c0_6, %c0_7] : memref<1x8x128xf32, #tpu.memory_space<vmem>>, vector<1x8x128xf32>
    tpu.vector_store %arg4[%c0_5, %c0_6, %c0_7], %3 {strides = array<i32>} : memref<1x8x128xf32, #tpu.memory_space<vmem>>, vector<1x8x128xf32>,
    return
  }
  func.func @transform_0(%arg0: i32, %arg1: i32) -> (i32, i32, i32) {
    %c0_i32 = arith.constant 0 : i32
    %c0_i32_0 = arith.constant 0 : i32
    %c0_i32_1 = arith.constant 0 : i32
    return %arg0, %c0_i32, %c0_i32_0 : i32, i32, i32
  }
  func.func @transform_1(%arg0: i32, %arg1: i32) -> (i32, i32, i32) {
    %c0_i32 = arith.constant 0 : i32
    %c0_i32_0 = arith.constant 0 : i32
    return %arg0, %arg1, %c0_i32 : i32, i32, i32
  }
  func.func @transform_2(%arg0: i32, %arg1: i32) -> (i32, i32, i32) {
    %c0_i32 = arith.constant 0 : i32
    %c0_i32_0 = arith.constant 0 : i32
    return %arg0, %arg1, %c0_i32 : i32, i32, i32
  }
}

</mosaic_0001>

<llo_original>
// kernel: tpu_custom_call.1
$region0: #{tpu_custom_call.1}
  #allocation0 [shape = 'u32[]', space=smem, size = 0x4, offset = 0x4, fixed_abs, tag = 'smem constant byte address 0x4 - core index']
  #allocation1 [shape = 'u32[144,128]{1,0:T(1,128)}', space=vmem, size = 0x12000, scoped, tag = 'internal scratch']
  %s0 = inlined_call_operand.hbm [shape: f32[2,1,128], index: 0, kind: input, shape index: {}]
  %s1 = inlined_call_operand.hbm [shape: f32[2,8,128], index: 1, kind: input, shape index: {}]
  %s2 = inlined_call_operand.hbm [shape: f32[2,8,128], index: 2, kind: output, shape index: {}]
  %s3 = sld [smem:[#allocation0]]
  $region49: #{tpu_custom_call.1} parent=0
    _
  %s5 = ssub.s32 1, %s3
  %s6 = scalar_select 0, %s5, %s3
  $region1: #{tpu_custom_call.1} parent=0
    #allocation2 [shape = 'u8[1024]{0}', space=vmem, size = 0x400, scoped, tag = 'input window, operand 0']
    #allocation3 [shape = 's32[2]{0}', space=sflag, size = 0x8, scoped, tag = 'scoped memory for tpu_custom_call.1']
    #allocation4 [shape = 's32[2]{0}', space=sflag, size = 0x8, scoped, tag = 'scoped memory for tpu_custom_call.1']
    #allocation5 [shape = 'u8[8192]{0}', space=vmem, size = 0x2000, scoped, tag = 'input window, operand 1']
    #allocation6 [shape = 's32[2]{0}', space=sflag, size = 0x8, scoped, tag = 'scoped memory for tpu_custom_call.1']
    #allocation7 [shape = 'u8[8192]{0}', space=vmem, size = 0x2000, scoped, tag = 'output window, operand 0']
    %7 = vsyncpa [#allocation3], 0
    %s8 = scalar_lea.sflag [#allocation3], 1
    %9 = vsyncpa %s8, 0
    %10 = vsyncpa [#allocation6], 0
    %s11 = scalar_lea.sflag [#allocation6], 1
    %12 = vsyncpa %s11, 0
    %13 = vsyncpa [#allocation4], 0
    %s14 = scalar_lea.sflag [#allocation4], 1
    %15 = vsyncpa %s14, 0
    loop: start=0, step=1, limit=4
    $region2: #{tpu_custom_call.1} parent=1 // loop_pre_header
      _
    $region3: #{tpu_custom_call.1} parent=1 // loop_header
      %s17 = sphi 0, %s21
      %p18 = scmp.ge.s32.totalorder %s17, 4
      %s24 = sphi 0, %s36
      %s25 = sphi 0, %s32
      %s26 = sphi 0, %s24
      %s27 = sphi 0, %s25
      %s28 = sphi 0, %s26
      %s29 = sphi 0, %s27
      %s39 = sphi 0, %s41
      %s42 = sphi 0, %s39
      %s43 = sphi 0, %s42
      %s59 = sphi 0, %s43
      %s67 = sphi 0, %s69
      %s70 = sphi 0, %s67
      %s71 = sphi 0, %s70
      %s87 = sphi 0, %s71
      %s95 = sphi 0, %s97
      %s98 = sphi 0, %s95
      %s99 = sphi 0, %s98
      %s115 = sphi 0, %s99
    $region4: #{tpu_custom_call.1} parent=1 // loop_header_branch
      %20 = sbr.rel (%p18) target = $region8
    $region5: #{tpu_custom_call.1} parent=1 // loop_body
      %s22 = ssub.s32 %s17, 1
      %s23 = ssub.s32 %s17, 2
      %s30 = sadd.s32 1, %s25
      %p31 = scmp.ge.s32.totalorder %s30, 1
      %s32 = scalar_select %p31, 0, %s30
      %s33 = sadd.s32 1, %s24
      %s34 = scalar_select %p31, %s33, %s24
      %p35 = scmp.ge.s32.totalorder %s34, 2
      %s36 = scalar_select %p35, 0, %s34
      %s37 = ssub.s32 %s24, %s36
      %p38 = scmp.eq.s32.totalorder %s37, 0
      %s40 = sadd.s32 %s39, 1
      %s41 = scalar_select %p38, %s39, %s40
      %p44 = pneg %p38
      %p45 = scmp.eq.s32.totalorder %s17, 1
      %p46 = por %p44, %p45
      %p47 = scmp.ne.s32.totalorder %s39, %s42
      %p48 = scmp.eq.s32.totalorder %s17, 0
      %p49 = por %p47, %p48
      %p50 = scmp.ne.s32.totalorder %s39, %s42
      %p51 = scmp.eq.s32.totalorder %s22, 1
      %p52 = por %p50, %p51
      %p53 = scmp.ne.s32.totalorder %s42, %s43
      %p54 = scmp.eq.s32.totalorder %s22, 0
      %p55 = por %p53, %p54
      %p56 = scmp.ne.s32.totalorder %s42, %s43
      %p57 = scmp.eq.s32.totalorder %s23, 1
      %p58 = por %p56, %p57
      %p60 = scmp.ne.s32.totalorder %s43, %s59
      %p61 = scmp.eq.s32.totalorder %s23, 0
      %p62 = por %p60, %p61
      %s63 = ssub.s32 %s24, %s36
      %s64 = ssub.s32 %s25, %s32
      %s65 = sor.u32 %s63, %s64
      %p66 = scmp.eq.s32.totalorder %s65, 0
      %s68 = sadd.s32 %s67, 1
      %s69 = scalar_select %p66, %s67, %s68
      %p72 = pneg %p66
      %p73 = scmp.eq.s32.totalorder %s17, 1
      %p74 = por %p72, %p73
      %p75 = scmp.ne.s32.totalorder %s67, %s70
      %p76 = scmp.eq.s32.totalorder %s17, 0
      %p77 = por %p75, %p76
      %p78 = scmp.ne.s32.totalorder %s67, %s70
      %p79 = scmp.eq.s32.totalorder %s22, 1
      %p80 = por %p78, %p79
      %p81 = scmp.ne.s32.totalorder %s70, %s71
      %p82 = scmp.eq.s32.totalorder %s22, 0
      %p83 = por %p81, %p82
      %p84 = scmp.ne.s32.totalorder %s70, %s71
      %p85 = scmp.eq.s32.totalorder %s23, 1
      %p86 = por %p84, %p85
      %p88 = scmp.ne.s32.totalorder %s71, %s87
      %p89 = scmp.eq.s32.totalorder %s23, 0
      %p90 = por %p88, %p89
      %s91 = ssub.s32 %s24, %s36
      %s92 = ssub.s32 %s25, %s32
      %s93 = sor.u32 %s91, %s92
      %p94 = scmp.eq.s32.totalorder %s93, 0
      %s96 = sadd.s32 %s95, 1
      %s97 = scalar_select %p94, %s95, %s96
      %p100 = pneg %p94
      %p101 = scmp.eq.s32.totalorder %s17, 1
      %p102 = por %p100, %p101
      %p103 = scmp.ne.s32.totalorder %s95, %s98
      %p104 = scmp.eq.s32.totalorder %s17, 0
      %p105 = por %p103, %p104
      %p106 = scmp.ne.s32.totalorder %s95, %s98
      %p107 = scmp.eq.s32.totalorder %s22, 1
      %p108 = por %p106, %p107
      %p109 = scmp.ne.s32.totalorder %s98, %s99
      %p110 = scmp.eq.s32.totalorder %s22, 0
      %p111 = por %p109, %p110
      %p112 = scmp.ne.s32.totalorder %s98, %s99
      %p113 = scmp.eq.s32.totalorder %s23, 1
      %p114 = por %p112, %p113
      %p116 = scmp.ne.s32.totalorder %s99, %s115
      %p117 = scmp.eq.s32.totalorder %s23, 0
      %p118 = por %p116, %p117
      %p119 = scmp.le.s32.totalorder 1, %s17
      %p120 = scmp.lt.s32.totalorder %s17, 3
      %p121 = pnand %p119, %p120
      %p122 = pneg %p121
      // Predicated region
      $region9: #{tpu_custom_call.1} parent=5 // pred_check
        _
      $region10: #{tpu_custom_call.1} parent=5 // pred_check_branch
        %124 = sbr.rel (%p121) target = $region12
      $region11: #{tpu_custom_call.1} parent=5 // pred_region
        %s125 = ssub.s32 %s17, 1
      $region12: #{tpu_custom_call.1} parent=5 // pred_fallthru
        _
      %p126 = scmp.lt.s32.totalorder %s17, 2
      // Predicated region
      $region13: #{tpu_custom_call.1} parent=5 // pred_check
        %p127 = pneg %p126
      $region14: #{tpu_custom_call.1} parent=5 // pred_check_branch
        %129 = sbr.rel (%p127) target = $region16
      $region15: #{tpu_custom_call.1} parent=5 // pred_region
        // Predicated region
        $region17: #{tpu_custom_call.1} parent=15 // pred_check
          %p130 = pneg %p49
        $region18: #{tpu_custom_call.1} parent=15 // pred_check_branch
          %132 = sbr.rel (%p130) target = $region20
        $region19: #{tpu_custom_call.1} parent=15 // pred_region
          %s133 = sand.u32 %s39, 1
          %s134 = scalar_lea.sflag [#allocation3], %s133
          %s135 = sand.u32 %s39, 1
          %s136 = scalar_lea.vmem [#allocation2], %s135
          %s138 = ssub.s32 16, 16
          %139 = vsyncadd %s134, %s138
          %s140 = smul.addr %s24, 16
          %s141 = scalar_lea.hbm %s0, %s140
          %s143 = sshll.u32 %s136, 4
          %s144 = int_to_ptr.vmem [resolvable:$true] %s143
          %146 = dma.hbm_to_vmem [thread:$0]  %s141, 16, %s144, %s134
        $region20: #{tpu_custom_call.1} parent=15 // pred_fallthru
          _
        // Predicated region
        $region21: #{tpu_custom_call.1} parent=15 // pred_check
          %p147 = pneg %p77
        $region22: #{tpu_custom_call.1} parent=15 // pred_check_branch
          %149 = sbr.rel (%p147) target = $region24
        $region23: #{tpu_custom_call.1} parent=15 // pred_region
          %s150 = sand.u32 %s67, 1
          %s151 = scalar_lea.sflag [#allocation6], %s150
          %s152 = sand.u32 %s67, 1
          %s153 = smul.addr %s152, 8
          %s154 = scalar_lea.vmem [#allocation5], %s153
          %s156 = ssub.s32 128, 128
          %157 = vsyncadd %s151, %s156
          %s158 = sadd.s32 %s25, %s24
          %s159 = smul.addr %s158, 128
          %s160 = scalar_lea.hbm %s1, %s159
          %s162 = sshll.u32 %s154, 4
          %s163 = int_to_ptr.vmem [resolvable:$true] %s162
          %165 = dma.hbm_to_vmem [thread:$0]  %s160, 128, %s163, %s151
        $region24: #{tpu_custom_call.1} parent=15 // pred_fallthru
          _
      $region16: #{tpu_custom_call.1} parent=5 // pred_fallthru
        _
      %p166 = scmp.le.s32.totalorder 1, %s17
      %p167 = scmp.lt.s32.totalorder %s17, 3
      %p168 = pnand %p166, %p167
      %p169 = pneg %p168
      // Predicated region
      $region25: #{tpu_custom_call.1} parent=5 // pred_check
        _
      $region26: #{tpu_custom_call.1} parent=5 // pred_check_branch
        %171 = sbr.rel (%p168) target = $region28
      $region27: #{tpu_custom_call.1} parent=5 // pred_region
        %s172 = ssub.s32 %s17, 1
        %s173 = sand.u32 %s42, 1
        %s174 = scalar_lea.sflag [#allocation3], %s173
        %s175 = sand.u32 %s42, 1
        %s176 = scalar_lea.vmem [#allocation2], %s175
        // Predicated region
        $region29: #{tpu_custom_call.1} parent=27 // pred_check
          %p177 = pneg %p55
        $region30: #{tpu_custom_call.1} parent=27 // pred_check_branch
          %179 = sbr.rel (%p177) target = $region32
        $region31: #{tpu_custom_call.1} parent=27 // pred_region
          %180 = dma.done %s174, 16
        $region32: #{tpu_custom_call.1} parent=27 // pred_fallthru
          _
        %s181 = sand.u32 %s70, 1
        %s182 = scalar_lea.sflag [#allocation6], %s181
        %s183 = sand.u32 %s70, 1
        %s184 = smul.addr %s183, 8
        %s185 = scalar_lea.vmem [#allocation5], %s184
        // Predicated region
        $region33: #{tpu_custom_call.1} parent=27 // pred_check
          %p186 = pneg %p83
        $region34: #{tpu_custom_call.1} parent=27 // pred_check_branch
          %188 = sbr.rel (%p186) target = $region36
        $region35: #{tpu_custom_call.1} parent=27 // pred_region
          %189 = dma.done %s182, 128
        $region36: #{tpu_custom_call.1} parent=27 // pred_fallthru
          _
        %s190 = sand.u32 %s42, 1
        %s191 = scalar_lea.sflag [#allocation3], %s190
        %s192 = sand.u32 %s42, 1
        %s193 = scalar_lea.vmem [#allocation2], %s192
        %p194 = pneg %p55
        %p195 = pneg %p52
        %s196 = sand.u32 %s70, 1
        %s197 = scalar_lea.sflag [#allocation6], %s196
        %s198 = sand.u32 %s70, 1
        %s199 = smul.addr %s198, 8
        %s200 = scalar_lea.vmem [#allocation5], %s199
        %p201 = pneg %p83
        %p202 = pneg %p80
        %p203 = pneg %p111
        %p204 = pneg %p108
        %s205 = sand.u32 %s98, 1
        %s206 = scalar_lea.sflag [#allocation4], %s205
        %s207 = sand.u32 %s98, 1
        %s208 = smul.addr %s207, 8
        %s209 = scalar_lea.vmem [#allocation7], %s208
        %v210 = vld [vmem:[%s185] sm:$0xff]
        %v211 = vld [vmem:[%s176] sm:$0x1]
        %v213 = vlaneseq
        %v214 = vshrl.u32 %v213, 7
        %v215 = vsub.s32 0, %v214
        %v216 = vrot.slane %v211, %v215
        %v218 = vmul.f32 %v210, %v216
        %219 = vst [vmem:[%s209] sm:$0xff] %v218
        %s220 = sand.u32 %s98, 1
        %s221 = scalar_lea.sflag [#allocation4], %s220
        %s222 = sand.u32 %s98, 1
        %s223 = smul.addr %s222, 8
        %s224 = scalar_lea.vmem [#allocation7], %s223
        // Predicated region
        $region37: #{tpu_custom_call.1} parent=27 // pred_check
          %p225 = pneg %p108
        $region38: #{tpu_custom_call.1} parent=27 // pred_check_branch
          %227 = sbr.rel (%p225) target = $region40
        $region39: #{tpu_custom_call.1} parent=27 // pred_region
          %s229 = ssub.s32 128, 128
          %230 = vsyncadd %s221, %s229
          %s231 = sadd.s32 %s27, %s26
          %s232 = smul.addr %s231, 128
          %s233 = scalar_lea.hbm %s2, %s232
          %s235 = sshll.u32 %s224, 4
          %s236 = int_to_ptr.vmem [resolvable:$true] %s235
          %238 = dma.vmem_to_hbm [thread:$0]  %s236, 128, %s233, %s221
        $region40: #{tpu_custom_call.1} parent=27 // pred_fallthru
          _
      $region28: #{tpu_custom_call.1} parent=5 // pred_fallthru
        _
      %p239 = scmp.le.s32.totalorder 2, %s17
      // Predicated region
      $region41: #{tpu_custom_call.1} parent=5 // pred_check
        %p240 = pneg %p239
      $region42: #{tpu_custom_call.1} parent=5 // pred_check_branch
        %242 = sbr.rel (%p240) target = $region44
      $region43: #{tpu_custom_call.1} parent=5 // pred_region
        %s243 = ssub.s32 %s17, 2
        // Predicated region
        $region45: #{tpu_custom_call.1} parent=43 // pred_check
          %p244 = pneg %p114
        $region46: #{tpu_custom_call.1} parent=43 // pred_check_branch
          %246 = sbr.rel (%p244) target = $region48
        $region47: #{tpu_custom_call.1} parent=43 // pred_region
          %s247 = sand.u32 %s99, 1
          %s248 = scalar_lea.sflag [#allocation4], %s247
          %s249 = sand.u32 %s99, 1
          %s250 = smul.addr %s249, 8
          %s251 = scalar_lea.vmem [#allocation7], %s250
          %252 = dma.done %s248, 128
        $region48: #{tpu_custom_call.1} parent=43 // pred_fallthru
          _
      $region44: #{tpu_custom_call.1} parent=5 // pred_fallthru
        _
    $region6: #{tpu_custom_call.1} parent=1 // loop_footer
      %s21 = sadd.s32 1, %s17
    $region7: #{tpu_custom_call.1} parent=1 // loop_footer_branch
      %16 = sbr.rel target = $region3
    $region8: #{tpu_custom_call.1} parent=1 // loop_exit
      _
    %253 = vsyncpa [#allocation3], 1
    %s254 = scalar_lea.sflag [#allocation3], 1
    %255 = vsyncpa %s254, 1
    %256 = vsyncpa [#allocation6], 1
    %s257 = scalar_lea.sflag [#allocation6], 1
    %258 = vsyncpa %s257, 1
    %259 = vsyncpa [#allocation4], 1
    %s260 = scalar_lea.sflag [#allocation4], 1
    %261 = vsyncpa %s260, 1

</llo_original>
